<compile_context>
chip_gen: v6e
topology: v6e:2x2x1
jax: 0.10.0
libtpu: 0.0.40
codegen_flags: <defaults>
</compile_context>

<pallas_src>
import functools

import jax
import jax.numpy as jnp
from jax.experimental import pallas as pl
from jax.experimental.pallas import tpu as pltpu


def _round_up(x: int, m: int) -> int:
    return ((x + m - 1) // m) * m


def _self_output_kernel(x_ref, wt_ref, b_ref, o_ref, *, compute_dtype):
    # x_ref:  (TM, H_in)   activations (streamed over the row grid axis)
    # wt_ref: (H_in, H_out) weight, already transposed (and pre-cast) in the wrapper
    # b_ref:  (1, H_out)   bias (f32)
    # o_ref:  (TM, H_out)
    x = x_ref[...].astype(compute_dtype)     # no-op if already compute_dtype
    w = wt_ref[...]                           # already compute_dtype (one-time wrapper cast)
    acc = jnp.dot(x, w, preferred_element_type=jnp.float32)   # MXU, f32 accumulation
    acc = acc + b_ref[...].astype(jnp.float32)
    o_ref[...] = acc.astype(o_ref.dtype)
    # Dropout is identity at inference (module.eval()); no-op here.


def vivit_self_output(hidden_states, input_tensor, weight, bias, *,
                      tm: int = 512, use_bf16_matmul: bool = True):
    """hidden_states: [B, S, H]; weight: [H_out, H_in] (PyTorch layout); bias: [H]."""
    del input_tensor  # residual is added in VivitLayer, not in VivitSelfOutput
    B, S, H = hidden_states.shape
    M = B * S

    x = hidden_states.reshape(M, H)

    # One-time O(H^2) transpose (+ optional bf16 cast) outside the kernel; ideally
    # done once at parameter-load time.  Removes per-step XLU/vreg transpose work.
    compute_dtype = jnp.bfloat16 if use_bf16_matmul else x.dtype
    wt = weight.T.astype(compute_dtype)            # [H_in, H_out]
    b2 = bias.reshape(1, H).astype(jnp.float32)

    # Row alignment: f32 blocks need multiples of 8 sublanes, bf16 blocks need 16.
    row_align = 16 if x.dtype == jnp.bfloat16 else 8
    tm_eff = min(tm, _round_up(M, row_align))
    tm_eff = _round_up(tm_eff, row_align)

    grid = (pl.cdiv(M, tm_eff),)  # partial tail block handled by Pallas masking

    kernel = functools.partial(_self_output_kernel, compute_dtype=compute_dtype)

    out = pl.pallas_call(
        kernel,
        out_shape=jax.ShapeDtypeStruct((M, H), hidden_states.dtype),
        grid=grid,
        in_specs=[
            pl.BlockSpec((tm_eff, H), lambda i: (i, 0)),  # streaming rows of x
            pl.BlockSpec((H, H), lambda i: (0, 0)),       # full W^T, VMEM-resident
            pl.BlockSpec((1, H), lambda i: (0, 0)),       # bias row, VMEM-resident
        ],
        out_specs=pl.BlockSpec((tm_eff, H), lambda i: (i, 0)),
        compiler_params=pltpu.CompilerParams(
            dimension_semantics=("parallel",)),           # v7x: shard rows over 2 TCs
    )(x, wt, b2)

    return out.reshape(B, S, H)


def _reference(hidden_states, weight, bias):
    # PyTorch Linear: y = x @ W.T + b, with W in [out, in] layout.
    return jnp.einsum("bsh,oh->bso", hidden_states, weight, precision="highest") + bias


if __name__ == "__main__":
    key = jax.random.PRNGKey(0)
    k_x, k_res, k_w, k_b, k_x2 = jax.random.split(key, 5)

    # Small synthetic config: batch=2, seq=8, hidden=32 (hidden_dropout_prob irrelevant in eval).
    B, S, H = 2, 8, 32
    hidden_states = jax.random.normal(k_x, (B, S, H), dtype=jnp.float32)
    input_tensor = jax.random.normal(k_res, (B, S, H), dtype=jnp.float32)  # unused by module
    weight = jax.random.normal(k_w, (H, H), dtype=jnp.float32) * 0.02      # PyTorch [out, in]
    bias = jax.random.normal(k_b, (H,), dtype=jnp.float32) * 0.02

    ref = _reference(hidden_states, weight, bias)

    # Default path: bf16 MXU operands, f32 accumulation, f32 activations in HBM.
    out = jax.block_until_ready(vivit_self_output(hidden_states, input_tensor, weight, bias))
    assert out.shape == (B, S, H) and out.dtype == hidden_states.dtype
    assert jnp.allclose(out, ref, atol=2e-2, rtol=2e-2), "mismatch vs reference (bf16 matmul)"

    # Exact-f32 path (flag preserved for numerics-sensitive use).
    out_f32 = jax.block_until_ready(
        vivit_self_output(hidden_states, input_tensor, weight, bias, use_bf16_matmul=False))
    assert jnp.allclose(out_f32, ref, atol=1e-4, rtol=1e-4), "mismatch vs reference (f32)"

    # Ragged row count (M = 2*13 = 26): exercises Pallas' masked partial tail block
    # (no host-side pad/slice anymore).
    S2 = 13
    hs2 = jax.random.normal(k_x2, (B, S2, H), dtype=jnp.float32)
    ref2 = _reference(hs2, weight, bias)
    out2 = jax.block_until_ready(vivit_self_output(hs2, None, weight, bias))
    assert out2.shape == (B, S2, H)
    assert jnp.allclose(out2, ref2, atol=2e-2, rtol=2e-2), "mismatch vs reference (ragged)"

    # bf16 activations end-to-end (v6e recommendation: halves x/y HBM traffic).
    hs_bf16 = hidden_states.astype(jnp.bfloat16)
    out_bf16 = jax.block_until_ready(vivit_self_output(hs_bf16, None, weight, bias))
    assert out_bf16.shape == (B, S, H) and out_bf16.dtype == jnp.bfloat16
    assert jnp.allclose(out_bf16.astype(jnp.float32), ref, atol=3e-2, rtol=3e-2), \
        "mismatch vs reference (bf16 activations)"

    print("KERNEL_OK")
</pallas_src>

<mosaic_0001>
module attributes {stable_mosaic.version = 11 : i64} {
  func.func @_self_output_kernel(%arg0: i32, %arg1: memref<16x32xf32, #tpu.memory_space<vmem>>, %arg2: memref<32x32xbf16, #tpu.memory_space<vmem>>, %arg3: memref<1x32xf32, #tpu.memory_space<vmem>>, %arg4: memref<16x32xf32, #tpu.memory_space<vmem>>) attributes {dimension_semantics = [#tpu.dimension_semantics<parallel>], iteration_bounds = array<i64: 1>, scalar_prefetch = 0 : i64, scratch_operands = 0 : i64, tpu.core_type = #tpu.core_type<tc>, window_params = [{transform_indices = @transform_0, window_bounds = array<i64: 16, 32>}, {pipeline_mode = #tpu.pipeline_mode<synchronous>, transform_indices = @transform_1, window_bounds = array<i64: 32, 32>}, {pipeline_mode = #tpu.pipeline_mode<synchronous>, transform_indices = @transform_2, window_bounds = array<i64: 1, 32>}, {transform_indices = @transform_3, window_bounds = array<i64: 16, 32>}]} {
    %c0 = arith.constant 0 : index
    %c0_0 = arith.constant 0 : index
    %0 = vector.load %arg1[%c0, %c0_0] : memref<16x32xf32, #tpu.memory_space<vmem>>, vector<16x32xf32>
    %1 = arith.truncf %0 : vector<16x32xf32> to vector<16x32xbf16>
    %c0_1 = arith.constant 0 : index
    %c0_2 = arith.constant 0 : index
    %2 = vector.load %arg2[%c0_1, %c0_2] : memref<32x32xbf16, #tpu.memory_space<vmem>>, vector<32x32xbf16>
    %cst = arith.constant dense<0.000000e+00> : vector<16x32xf32>
    %3 = tpu.matmul %1, %2, %cst {dimension_numbers = #tpu.dot_dimension_numbers<[1], [0], [0], [1], [0, 0, 1, 1], [], []>} : vector<16x32xbf16>, vector<32x32xbf16>, vector<16x32xf32> -> vector<16x32xf32>
    %c0_3 = arith.constant 0 : index
    %c0_4 = arith.constant 0 : index
    %4 = vector.load %arg3[%c0_3, %c0_4] : memref<1x32xf32, #tpu.memory_space<vmem>>, vector<1x32xf32>
    %5 = vector.broadcast %4 : vector<1x32xf32> to vector<16x32xf32>
    %6 = arith.addf %3, %5 : vector<16x32xf32>
    %c0_5 = arith.constant 0 : index
    %c0_6 = arith.constant 0 : index
    %7 = vector.load %arg4[%c0_5, %c0_6] : memref<16x32xf32, #tpu.memory_space<vmem>>, vector<16x32xf32>
    tpu.vector_store %arg4[%c0_5, %c0_6], %6 {strides = array<i32>} : memref<16x32xf32, #tpu.memory_space<vmem>>, vector<16x32xf32>,
    return
  }
  func.func @transform_0(%arg0: i32) -> (i32, i32) {
    %c0_i32 = arith.constant 0 : i32
    %c0_i32_0 = arith.constant 0 : i32
    return %arg0, %c0_i32 : i32, i32
  }
  func.func @transform_1(%arg0: i32) -> (i32, i32) {
    %c0_i32 = arith.constant 0 : i32
    %c0_i32_0 = arith.constant 0 : i32
    %c0_i32_1 = arith.constant 0 : i32
    return %c0_i32, %c0_i32_0 : i32, i32
  }
  func.func @transform_2(%arg0: i32) -> (i32, i32) {
    %c0_i32 = arith.constant 0 : i32
    %c0_i32_0 = arith.constant 0 : i32
    %c0_i32_1 = arith.constant 0 : i32
    return %c0_i32, %c0_i32_0 : i32, i32
  }
  func.func @transform_3(%arg0: i32) -> (i32, i32) {
    %c0_i32 = arith.constant 0 : i32
    %c0_i32_0 = arith.constant 0 : i32
    return %arg0, %c0_i32 : i32, i32
  }
}

</mosaic_0001>

<llo_original>
// kernel: tpu_custom_call.1
$region0: #{tpu_custom_call.1}
  #allocation0 [shape = 'u32[]', space=smem, size = 0x4, offset = 0x4, fixed_abs, tag = 'smem constant byte address 0x4 - core index']
  #allocation1 [shape = 'u32[144,128]{1,0:T(1,128)}', space=vmem, size = 0x12000, scoped, tag = 'internal scratch']
  %s0 = inlined_call_operand.hbm [shape: f32[16,32], index: 0, kind: input, shape index: {}]
  %s1 = inlined_call_operand.hbm [shape: bf16[32,32], index: 1, kind: input, shape index: {}]
  %s2 = inlined_call_operand.vmem [shape: f32[1,32], index: 2, kind: input, shape index: {}]
  %s3 = inlined_call_operand.hbm [shape: f32[16,32], index: 3, kind: output, shape index: {}]
  %s4 = sld [smem:[#allocation0]]
  $region30: #{tpu_custom_call.1} parent=0
    _
  %s6 = ssub.s32 1, %s4
  %s7 = scalar_select 0, %s6, %s4
  $region1: #{tpu_custom_call.1} parent=0
    #allocation2 [shape = 'u8[8192]{0}', space=vmem, size = 0x2000, scoped, tag = 'input window, operand 0, single buffered']
    #allocation3 [shape = 's32[1]{0}', space=sflag, size = 0x4, scoped, tag = 'scoped memory for tpu_custom_call.1']
    #allocation4 [shape = 's32[1]{0}', space=sflag, size = 0x4, scoped, tag = 'scoped memory for tpu_custom_call.1']
    #allocation5 [shape = 'u8[8192]{0}', space=vmem, size = 0x2000, scoped, tag = 'input window, operand 1, single buffered']
    #allocation6 [shape = 's32[1]{0}', space=sflag, size = 0x4, scoped, tag = 'scoped memory for tpu_custom_call.1']
    #allocation7 [shape = 'u8[8192]{0}', space=vmem, size = 0x2000, scoped, tag = 'output window, operand 0, single buffered']
    %8 = vsyncpa [#allocation3], 0
    %9 = vsyncpa [#allocation6], 0
    %10 = vsyncpa [#allocation4], 0
    // Predicated region
    $region2: #{tpu_custom_call.1} parent=1 // pred_check
      _
    $region3: #{tpu_custom_call.1} parent=1 // pred_check_branch
      %12 = sbr.rel (0) target = $region5
    $region4: #{tpu_custom_call.1} parent=1 // pred_region
      %s14 = ssub.s32 256, 256
      %15 = vsyncadd [#allocation3], %s14
      %s16 = sshll.u32 [#allocation2], 4
      %s17 = int_to_ptr.vmem [resolvable:$true] %s16
      %22 = dma.hbm_to_vmem [thread:$0]  %s0, 256, %s17, [#allocation3], 128, 128, 8
    $region5: #{tpu_custom_call.1} parent=1 // pred_fallthru
      _
    // Predicated region
    $region6: #{tpu_custom_call.1} parent=1 // pred_check
      _
    $region7: #{tpu_custom_call.1} parent=1 // pred_check_branch
      %24 = sbr.rel (0) target = $region9
    $region8: #{tpu_custom_call.1} parent=1 // pred_region
      %s26 = ssub.s32 256, 256
      %27 = vsyncadd [#allocation6], %s26
      %s28 = sshll.u32 [#allocation5], 4
      %s29 = int_to_ptr.vmem [resolvable:$true] %s28
      %34 = dma.hbm_to_vmem [thread:$0]  %s1, 256, %s29, [#allocation6], 64, 64, 4
    $region9: #{tpu_custom_call.1} parent=1 // pred_fallthru
      _
    // Predicated region
    $region10: #{tpu_custom_call.1} parent=1 // pred_check
      _
    $region11: #{tpu_custom_call.1} parent=1 // pred_check_branch
      %36 = sbr.rel (0) target = $region13
    $region12: #{tpu_custom_call.1} parent=1 // pred_region
      _
    $region13: #{tpu_custom_call.1} parent=1 // pred_fallthru
      _
    // Predicated region
    $region14: #{tpu_custom_call.1} parent=1 // pred_check
      _
    $region15: #{tpu_custom_call.1} parent=1 // pred_check_branch
      %38 = sbr.rel (0) target = $region17
    $region16: #{tpu_custom_call.1} parent=1 // pred_region
      %39 = dma.done [#allocation3], 256
    $region17: #{tpu_custom_call.1} parent=1 // pred_fallthru
      _
    // Predicated region
    $region18: #{tpu_custom_call.1} parent=1 // pred_check
      _
    $region19: #{tpu_custom_call.1} parent=1 // pred_check_branch
      %41 = sbr.rel (0) target = $region21
    $region20: #{tpu_custom_call.1} parent=1 // pred_region
      %42 = dma.done [#allocation6], 256
    $region21: #{tpu_custom_call.1} parent=1 // pred_fallthru
      _
    %v44 = vld [vmem:[#allocation2] sm:$0xff]
    %v45 = vld [vmem:[#allocation2 + $0x8] sm:$0xff]
    %v46 = vpack.c.bf16 %v45, %v44
    %v47 = vld [vmem:[#allocation5] sm:$0xf]
    %v48 = vld [vmem:[#allocation5 + $0x4] sm:$0xf]
    %v49 = vld [vmem:[#allocation5 + $0x8] sm:$0xf]
    %v50 = vld [vmem:[#allocation5 + $0xc] sm:$0xf]
    %v51 = vld [vmem:[%s2] sm:$0x1]
    %v53 = vlaneseq
    %v54 = vshrl.u32 %v53, 7
    %v55 = vsub.s32 0, %v54
    %v56 = vrot.slane %v51, %v55
    %v62 = vunpack.c.l.b16 %v47
    %v63 = vunpack.c.l.b16 %v48
    %v64 = vunpack.c.l.b16 %v49
    %v65 = vunpack.c.l.b16 %v50
    %v66 = vpack.c.b16 %v63, %v62
    %v67 = vpack.c.b16 %v65, %v64
    %vm70 = vcmask 261120
    %v72 = vsel %vm70, %v46, 0
    %74 = vmatprep.subr.bf16.mxu0 0
    %75 = vmatpush1.bf16.msra.mxu0 0
    %76 = vmatprep.subr.bf16.mxu0 0
    %77 = vmatpush1.bf16.msra.mxu0 0
    %78 = vmatprep.subr.bf16.mxu0 0
    %79 = vmatpush1.bf16.msra.mxu0 0
    %80 = vmatprep.subr.bf16.mxu0 0
    %81 = vmatpush1.bf16.msra.mxu0 0
    %82 = vmatprep.subr.bf16.mxu0 0
    %83 = vmatpush1.bf16.msra.mxu0 0
    %84 = vmatprep.subr.bf16.mxu0 0
    %85 = vmatpush1.bf16.msra.mxu0 0
    %86 = vmatprep.subr.bf16.mxu0 0
    %87 = vmatpush1.bf16.msra.mxu0 %v67
    %88 = vmatprep.subr.bf16.mxu0 0
    %89 = vmatpush1.bf16.msra.mxu0 %v66
    %90 = vmatprep.subr.bf16.mxu0 0
    %91 = vmatpush2.bf16.msra.mxu0 0
    %92 = vmatprep.subr.bf16.mxu0 0
    %93 = vmatpush2.bf16.msra.mxu0 0
    %94 = vmatprep.subr.bf16.mxu0 0
    %95 = vmatpush2.bf16.msra.mxu0 0
    %96 = vmatprep.subr.bf16.mxu0 0
    %97 = vmatpush2.bf16.msra.mxu0 0
    %98 = vmatprep.subr.bf16.mxu0 0
    %99 = vmatpush2.bf16.msra.mxu0 0
    %100 = vmatprep.subr.bf16.mxu0 0
    %101 = vmatpush2.bf16.msra.mxu0 0
    %102 = vmatprep.subr.bf16.mxu0 0
    %103 = vmatpush2.bf16.msra.mxu0 0
    %104 = vmatprep.subr.bf16.mxu0 0
    %105 = vmatpush2.bf16.msra.mxu0 0
    %106 = vmatprep.mubr.bf16.mxu0 0
    %107 = vmatmul.mubr.bf16.gmra.mxu0 %v72
    %v108 = vpop.f32.mrf.mxu0
    %v109 = vadd.f32 %v56, %v108
    %v110 = vpop.f32.mrf.mxu0
    %v111 = vpop.f32.mrf.mxu0
    %v112 = vadd.f32 %v56, %v111
    %v113 = vpop.f32.mrf.mxu0
    %114 = vdwg.mxu0
    %115 = vst.msk [vmem:[#allocation7] sm:$0xff] %vm70, %v109
    %116 = vst.msk [vmem:[#allocation7 + $0x8] sm:$0xff] %vm70, %v112
    // Predicated region
    $region22: #{tpu_custom_call.1} parent=1 // pred_check
      _
    $region23: #{tpu_custom_call.1} parent=1 // pred_check_branch
      %118 = sbr.rel (0) target = $region25
    $region24: #{tpu_custom_call.1} parent=1 // pred_region
      %s120 = ssub.s32 256, 256
      %121 = vsyncadd [#allocation4], %s120
      %s122 = sshll.u32 [#allocation7], 4
      %s123 = int_to_ptr.vmem [resolvable:$true] %s122
      %128 = dma.vmem_to_hbm [thread:$0]  %s123, 256, %s3, [#allocation4], 128, 128, 8
    $region25: #{tpu_custom_call.1} parent=1 // pred_fallthru
      _
    // Predicated region
    $region26: #{tpu_custom_call.1} parent=1 // pred_check
      _
    $region27: #{tpu_custom_call.1} parent=1 // pred_check_branch
      %130 = sbr.rel (0) target = $region29
    $region28: #{tpu_custom_call.1} parent=1 // pred_region
      %131 = dma.done [#allocation4], 256
    $region29: #{tpu_custom_call.1} parent=1 // pred_fallthru
      _
    %132 = vsyncpa [#allocation3], 1
    %133 = vsyncpa [#allocation6], 1
    %134 = vsyncpa [#allocation4], 1

</llo_original>
